<compile_context>
chip_gen: v5e
topology: v5e:2x2
jax: 0.10.0
libtpu: 0.0.40
codegen_flags: <defaults>
</compile_context>

<pallas_src>
import functools

import jax
import jax.numpy as jnp
from jax.experimental import pallas as pl
from jax.experimental.pallas import tpu as pltpu


# --------------------------------------------------------------------------- #
# Kernel
# --------------------------------------------------------------------------- #
def fused_affine_kernel(x_ref, w_ref, b_ref, o_ref):
    # x_ref: (TB, K)       VMEM  (f32 or bf16)
    # w_ref: (K, N_pad)    VMEM  resident across grid steps (index_map -> (0,0))
    # b_ref: (1, N_pad)    VMEM  resident, f32
    # o_ref: (TB, N_pad)   VMEM  lane-dense store
    acc = jnp.dot(x_ref[...], w_ref[...], preferred_element_type=jnp.float32)
    o_ref[...] = (acc + b_ref[...]).astype(o_ref.dtype)


# --------------------------------------------------------------------------- #
# One-time parameter folding (NOT inside the per-call jit path)
# --------------------------------------------------------------------------- #
def _round_up(x, m):
    return ((x + m - 1) // m) * m


def fold_weights(w0, b0, w1, b1, w2, b2, *, lane=128):
    """Fold l0 -> l1 -> l2 into one affine map, padded to a lane-dense N.

    Torch conventions:
      w0: (L, L),       b0: (L,)       l0(x)[b,c,l] = sum_m x[b,c,m]*w0[l,m] + b0[l]
      w1: (Cout, Cin),  b1: (Cout,)    1x1 conv channel mix
      w2: (Cout, O, L), b2: (Cout, O)  per-channel Linear
    Returns:
      w_tot: (Cin*L, N_pad), b_tot: (1, N_pad)  with N_pad = round_up(Cout*O, 128);
      columns beyond Cout*O are zero.
    """
    Cout, O, L = w2.shape
    Cin = w1.shape[1]
    # W_tot[c, l', o, m] = sum_l w2[o,m,l] * w1[o,c] * w0[l,l']
    w_tot = jnp.einsum("oml,oc,lp->cpom", w2, w1, w0).reshape(Cin * L, Cout * O)
    # Bias flowing through l1, l2:
    #   g_bias[o, l] = (sum_c w1[o,c]) * b0[l] + b1[o]
    #   B_tot[o, m]  = sum_l w2[o,m,l] * g_bias[o,l] + b2[o,m]
    g_bias = jnp.sum(w1, axis=1)[:, None] * b0[None, :] + b1[:, None]       # (Cout, L)
    b_tot = (jnp.einsum("oml,ol->om", w2, g_bias) + b2).reshape(1, Cout * O)

    n = Cout * O
    n_pad = _round_up(n, lane)
    if n_pad != n:
        w_tot = jnp.pad(w_tot, ((0, 0), (0, n_pad - n)))
        b_tot = jnp.pad(b_tot, ((0, 0), (0, n_pad - n)))
    return w_tot, b_tot


# --------------------------------------------------------------------------- #
# Forward on pre-folded params
# --------------------------------------------------------------------------- #
@functools.partial(jax.jit, static_argnames=("cout", "o", "tb", "use_bf16"))
def linear_forward(x, w_tot, b_tot, *, cout, o, tb=512, use_bf16=False):
    """x: (B, Cin, L).  w_tot: (Cin*L, N_pad), b_tot: (1, N_pad) from fold_weights.
    Returns (B, cout, o)."""
    B, Cin, L = x.shape
    K = Cin * L
    n_pad = w_tot.shape[1]

    x2d = x.reshape(B, K)
    if use_bf16:
        # bf16 MXU operands, f32 accumulate inside the kernel.
        x2d = x2d.astype(jnp.bfloat16)
        w_in = w_tot.astype(jnp.bfloat16)
    else:
        w_in = w_tot

    # Pad B to a multiple of 8 sublanes (full f32 vregs), tile with TB rows.
    tb_eff = min(tb, _round_up(B, 8))
    tb_eff = _round_up(tb_eff, 8)
    b_pad = _round_up(B, tb_eff)
    if b_pad != B:
        x2d = jnp.pad(x2d, ((0, b_pad - B), (0, 0)))

    grid = (b_pad // tb_eff,)

    out2d = pl.pallas_call(
        fused_affine_kernel,
        out_shape=jax.ShapeDtypeStruct((b_pad, n_pad), x.dtype),
        grid_spec=pltpu.PrefetchScalarGridSpec(
            num_scalar_prefetch=0,
            grid=grid,
            in_specs=[
                pl.BlockSpec((tb_eff, K), lambda i: (i, 0)),
                pl.BlockSpec((K, n_pad), lambda i: (0, 0)),   # weight resident
                pl.BlockSpec((1, n_pad), lambda i: (0, 0)),   # bias resident
            ],
            out_specs=pl.BlockSpec((tb_eff, n_pad), lambda i: (i, 0)),
        ),
        compiler_params=pltpu.CompilerParams(
            # B-axis tiles are independent -> megacore sharding on v7x.
            dimension_semantics=("parallel",),
        ),
    )(x2d, w_in, b_tot)

    return out2d[:B, : cout * o].reshape(B, cout, o)


# --------------------------------------------------------------------------- #
# Pure-JAX reference (un-folded chain, matches the PyTorch forward)
# --------------------------------------------------------------------------- #
def reference_forward(x, w0, b0, w1, b1, w2, b2):
    h = jnp.einsum("bcl,ml->bcm", x, w0) + b0                   # l0: Linear
    h = jnp.einsum("bcl,oc->bol", h, w1) + b1[None, :, None]    # l1: Conv1d k=1
    out = jnp.einsum("bol,oml->bom", h, w2) + b2[None, :, :]    # l2: split_linear
    return out


if __name__ == "__main__":
    # Shapes consistent with the module:
    #   input_dim=4 (len(args.input_column)), output_dim=3 (len(args.output_column)),
    #   input_size=32, output_size=16, batch=2.
    B, Cin, Cout, L, O = 2, 4, 3, 32, 16

    key = jax.random.PRNGKey(0)
    ks = jax.random.split(key, 8)

    x = jax.random.normal(ks[0], (B, Cin, L), dtype=jnp.float32)

    # Deterministic torch-like init (uniform +- 1/sqrt(fan_in)).
    w0 = jax.random.uniform(ks[1], (L, L), jnp.float32, -1.0, 1.0) / jnp.sqrt(L)
    b0 = jax.random.uniform(ks[2], (L,), jnp.float32, -1.0, 1.0) / jnp.sqrt(L)
    w1 = jax.random.uniform(ks[3], (Cout, Cin), jnp.float32, -1.0, 1.0) / jnp.sqrt(Cin)
    b1 = jax.random.uniform(ks[4], (Cout,), jnp.float32, -1.0, 1.0) / jnp.sqrt(Cin)
    w2 = jax.random.uniform(ks[5], (Cout, O, L), jnp.float32, -1.0, 1.0) / jnp.sqrt(L)
    b2 = jax.random.uniform(ks[6], (Cout, O), jnp.float32, -1.0, 1.0) / jnp.sqrt(L)

    # Fold ONCE at "set params" time; the jitted forward only sees w_tot/b_tot.
    w_tot, b_tot = fold_weights(w0, b0, w1, b1, w2, b2)
    w_tot, b_tot = jax.block_until_ready((w_tot, b_tot))

    ref = reference_forward(x, w0, b0, w1, b1, w2, b2)

    # f32-operand path (tight tolerance).
    out = linear_forward(x, w_tot, b_tot, cout=Cout, o=O)
    out = jax.block_until_ready(out)
    assert out.shape == (B, Cout, O), out.shape
    err = float(jnp.max(jnp.abs(out - ref)))
    assert err < 1e-4, err

    # bf16-operand path (f32 accumulate); looser, relative tolerance.
    out_bf16 = linear_forward(x, w_tot, b_tot, cout=Cout, o=O, use_bf16=True)
    out_bf16 = jax.block_until_ready(out_bf16)
    rel = float(jnp.max(jnp.abs(out_bf16 - ref)) / (jnp.max(jnp.abs(ref)) + 1e-6))
    assert rel < 5e-2, rel

    print("KERNEL_OK")
</pallas_src>

<mosaic_0001>
module attributes {stable_mosaic.version = 11 : i64} {
  func.func @fused_affine_kernel(%arg0: i32, %arg1: memref<8x128xf32, #tpu.memory_space<vmem>>, %arg2: memref<128x128xf32, #tpu.memory_space<vmem>>, %arg3: memref<1x128xf32, #tpu.memory_space<vmem>>, %arg4: memref<8x128xf32, #tpu.memory_space<vmem>>) attributes {dimension_semantics = [#tpu.dimension_semantics<parallel>], iteration_bounds = array<i64: 1>, scalar_prefetch = 0 : i64, scratch_operands = 0 : i64, tpu.core_type = #tpu.core_type<tc>, window_params = [{transform_indices = @transform_0, window_bounds = array<i64: 8, 128>}, {pipeline_mode = #tpu.pipeline_mode<synchronous>, transform_indices = @transform_1, window_bounds = array<i64: 128, 128>}, {pipeline_mode = #tpu.pipeline_mode<synchronous>, transform_indices = @transform_2, window_bounds = array<i64: 1, 128>}, {transform_indices = @transform_3, window_bounds = array<i64: 8, 128>}]} {
    %c0 = arith.constant 0 : index
    %c0_0 = arith.constant 0 : index
    %0 = vector.load %arg1[%c0, %c0_0] : memref<8x128xf32, #tpu.memory_space<vmem>>, vector<8x128xf32>
    %c0_1 = arith.constant 0 : index
    %c0_2 = arith.constant 0 : index
    %1 = vector.load %arg2[%c0_1, %c0_2] : memref<128x128xf32, #tpu.memory_space<vmem>>, vector<128x128xf32>
    %cst = arith.constant dense<0.000000e+00> : vector<8x128xf32>
    %2 = tpu.matmul %0, %1, %cst {dimension_numbers = #tpu.dot_dimension_numbers<[1], [0], [0], [1], [0, 0, 1, 1], [], []>} : vector<8x128xf32>, vector<128x128xf32>, vector<8x128xf32> -> vector<8x128xf32>
    %c0_3 = arith.constant 0 : index
    %c0_4 = arith.constant 0 : index
    %3 = vector.load %arg3[%c0_3, %c0_4] : memref<1x128xf32, #tpu.memory_space<vmem>>, vector<1x128xf32>
    %4 = vector.broadcast %3 : vector<1x128xf32> to vector<8x128xf32>
    %5 = arith.addf %2, %4 : vector<8x128xf32>
    %c0_5 = arith.constant 0 : index
    %c0_6 = arith.constant 0 : index
    %6 = vector.load %arg4[%c0_5, %c0_6] : memref<8x128xf32, #tpu.memory_space<vmem>>, vector<8x128xf32>
    tpu.vector_store %arg4[%c0_5, %c0_6], %5 {strides = array<i32>} : memref<8x128xf32, #tpu.memory_space<vmem>>, vector<8x128xf32>,
    return
  }
  func.func @transform_0(%arg0: i32) -> (i32, i32) {
    %c0_i32 = arith.constant 0 : i32
    %c0_i32_0 = arith.constant 0 : i32
    return %arg0, %c0_i32 : i32, i32
  }
  func.func @transform_1(%arg0: i32) -> (i32, i32) {
    %c0_i32 = arith.constant 0 : i32
    %c0_i32_0 = arith.constant 0 : i32
    %c0_i32_1 = arith.constant 0 : i32
    return %c0_i32, %c0_i32_0 : i32, i32
  }
  func.func @transform_2(%arg0: i32) -> (i32, i32) {
    %c0_i32 = arith.constant 0 : i32
    %c0_i32_0 = arith.constant 0 : i32
    %c0_i32_1 = arith.constant 0 : i32
    return %c0_i32, %c0_i32_0 : i32, i32
  }
  func.func @transform_3(%arg0: i32) -> (i32, i32) {
    %c0_i32 = arith.constant 0 : i32
    %c0_i32_0 = arith.constant 0 : i32
    return %arg0, %c0_i32 : i32, i32
  }
}

</mosaic_0001>

<llo_original>
// kernel: linear_forward.1
$region0: #{linear_forward.1}
  #allocation0 [shape = 'u32[]', space=smem, size = 0x4, offset = 0x4, fixed_abs, tag = 'smem constant byte address 0x4 - core index']
  #allocation1 [shape = 'u32[72,128]{1,0:T(1,128)}', space=vmem, size = 0x9000, scoped, tag = 'internal scratch']
  %s0 = inlined_call_operand.vmem [shape: f32[8,128], index: 0, kind: input, shape index: {}]
  %s1 = inlined_call_operand.hbm [shape: f32[128,128], index: 1, kind: input, shape index: {}]
  %s2 = inlined_call_operand.vmem [shape: f32[1,128], index: 2, kind: input, shape index: {}]
  %s3 = inlined_call_operand.vmem [shape: f32[8,128], index: 3, kind: output, shape index: {}]
  %s4 = sld [smem:[#allocation0]]
  $region26: #{linear_forward.1} parent=0
    _
  %s6 = ssub.s32 1, %s4
  %s7 = scalar_select 0, %s6, %s4
  $region1: #{linear_forward.1} parent=0
    #allocation2 [shape = 'u8[65536]{0}', space=vmem, size = 0x10000, scoped, tag = 'input window, operand 1, single buffered']
    #allocation3 [shape = 's32[1]{0}', space=sflag, size = 0x4, scoped, tag = 'scoped memory for linear_forward.1']
    %8 = vsyncpa [#allocation3], 0
    // Predicated region
    $region2: #{linear_forward.1} parent=1 // pred_check
      _
    $region3: #{linear_forward.1} parent=1 // pred_check_branch
      %10 = sbr.rel (0) target = $region5
    $region4: #{linear_forward.1} parent=1 // pred_region
      _
    $region5: #{linear_forward.1} parent=1 // pred_fallthru
      _
    // Predicated region
    $region6: #{linear_forward.1} parent=1 // pred_check
      _
    $region7: #{linear_forward.1} parent=1 // pred_check_branch
      %12 = sbr.rel (0) target = $region9
    $region8: #{linear_forward.1} parent=1 // pred_region
      %14 = vsyncadd [#allocation3], 0
      %s15 = sshll.u32 %s1, 4
      %s16 = int_to_ptr.hbm [resolvable:$true] %s15
      %s17 = sshll.u32 [#allocation2], 4
      %s18 = int_to_ptr.vmem [resolvable:$true] %s17
      %23 = dma.hbm_to_vmem [thread:$0]  %s16, 2048, %s18, [#allocation3], 128, 128, 8
    $region9: #{linear_forward.1} parent=1 // pred_fallthru
      _
    // Predicated region
    $region10: #{linear_forward.1} parent=1 // pred_check
      _
    $region11: #{linear_forward.1} parent=1 // pred_check_branch
      %25 = sbr.rel (0) target = $region13
    $region12: #{linear_forward.1} parent=1 // pred_region
      _
    $region13: #{linear_forward.1} parent=1 // pred_fallthru
      _
    // Predicated region
    $region14: #{linear_forward.1} parent=1 // pred_check
      _
    $region15: #{linear_forward.1} parent=1 // pred_check_branch
      %27 = sbr.rel (0) target = $region17
    $region16: #{linear_forward.1} parent=1 // pred_region
      %29 = dma.done [#allocation3], 2048
    $region17: #{linear_forward.1} parent=1 // pred_fallthru
      _
    %v30 = vld [vmem:[%s0] sm:$0xff]
    %v31 = vld [vmem:[#allocation2] sm:$0xff]
    %v32 = vld [vmem:[#allocation2 + $0x8] sm:$0xff]
    %v33 = vld [vmem:[#allocation2 + $0x10] sm:$0xff]
    %v34 = vld [vmem:[#allocation2 + $0x18] sm:$0xff]
    %v35 = vld [vmem:[#allocation2 + $0x20] sm:$0xff]
    %v36 = vld [vmem:[#allocation2 + $0x28] sm:$0xff]
    %v37 = vld [vmem:[#allocation2 + $0x30] sm:$0xff]
    %v38 = vld [vmem:[#allocation2 + $0x38] sm:$0xff]
    %v39 = vld [vmem:[#allocation2 + $0x40] sm:$0xff]
    %v40 = vld [vmem:[#allocation2 + $0x48] sm:$0xff]
    %v41 = vld [vmem:[#allocation2 + $0x50] sm:$0xff]
    %v42 = vld [vmem:[#allocation2 + $0x58] sm:$0xff]
    %v43 = vld [vmem:[#allocation2 + $0x60] sm:$0xff]
    %v44 = vld [vmem:[#allocation2 + $0x68] sm:$0xff]
    %v45 = vld [vmem:[#allocation2 + $0x70] sm:$0xff]
    %v46 = vld [vmem:[#allocation2 + $0x78] sm:$0xff]
    %v47 = vld [vmem:[%s2] sm:$0x1]
    %v49 = vperm.slane %v47, 0
    %51 = vmatpush.msra.mxu0 %v46
    %52 = vmatpush.msra.mxu0 %v45
    %53 = vmatpush.msra.mxu0 %v44
    %54 = vmatpush.msra.mxu0 %v43
    %55 = vmatpush.msra.mxu0 %v42
    %56 = vmatpush.msra.mxu0 %v41
    %57 = vmatpush.msra.mxu0 %v40
    %58 = vmatpush.msra.mxu0 %v39
    %59 = vmatpush.msra.mxu0 %v38
    %60 = vmatpush.msra.mxu0 %v37
    %61 = vmatpush.msra.mxu0 %v36
    %62 = vmatpush.msra.mxu0 %v35
    %63 = vmatpush.msra.mxu0 %v34
    %64 = vmatpush.msra.mxu0 %v33
    %65 = vmatpush.msra.mxu0 %v32
    %66 = vmatpush.msra.mxu0 %v31
    %67 = vmatmul.f32.gmra.mxu0 %v30
    %v68 = vpop.f32.mrf.mxu0
    %v69 = vadd.f32 %v49, %v68
    %70 = vdwg.mxu0
    %71 = vst [vmem:[%s3] sm:$0xff] %v69
    // Predicated region
    $region18: #{linear_forward.1} parent=1 // pred_check
      _
    $region19: #{linear_forward.1} parent=1 // pred_check_branch
      %73 = sbr.rel (0) target = $region21
    $region20: #{linear_forward.1} parent=1 // pred_region
      _
    $region21: #{linear_forward.1} parent=1 // pred_fallthru
      _
    // Predicated region
    $region22: #{linear_forward.1} parent=1 // pred_check
      _
    $region23: #{linear_forward.1} parent=1 // pred_check_branch
      %75 = sbr.rel (0) target = $region25
    $region24: #{linear_forward.1} parent=1 // pred_region
      _
    $region25: #{linear_forward.1} parent=1 // pred_fallthru
      _
    %76 = vsyncpa [#allocation3], 1

</llo_original>
